<compile_context>
chip_gen: v5e
topology: v5e:2x2
jax: 0.10.0
libtpu: 0.0.40
codegen_flags: <defaults>
</compile_context>

<pallas_src>
import jax
import jax.numpy as jnp
from jax.experimental import pallas as pl
from jax.experimental.pallas import tpu as pltpu

LANES = 128   # lane-dense width used for every intermediate / the output slab
H1 = 64       # fc_E1 / fc_F1 / fc1 logical hidden width
H_CAT = 128   # concat width (64 + 64)


def mlp2_kernel(ef_ref, wef_ref, w1_ref, w2_ref, bias_ref, o_ref):
    # Fused input projection: one [TB,2]x[2,128] MXU matmul replaces the two
    # [B,1]x[1,64] projections + the cross-lane concatenate.
    x_all = jnp.dot(ef_ref[...], wef_ref[...], preferred_element_type=jnp.float32)
    x_all = jnp.maximum(x_all + bias_ref[0:1, :], 0.0)                  # [TB, 128]

    # x = relu(fc1(x_all)); fc1 padded to 128 output lanes (cols 64.. stay 0).
    h = jnp.dot(x_all, w1_ref[...], preferred_element_type=jnp.float32)
    h = jnp.maximum(h + bias_ref[1:2, :], 0.0)                          # [TB, 128]

    # x = fc2(x); weight padded to 128x128 so the store is an unmasked dense vst.
    out = jnp.dot(h, w2_ref[...], preferred_element_type=jnp.float32)
    o_ref[...] = (out + bias_ref[2:3, :]).astype(o_ref.dtype)           # [TB, 128]


def _round_up(x, m):
    return ((x + m - 1) // m) * m


def pack_params(params):
    """One-time host-side repack of MLPModel2 params into 4 lane-dense arrays."""
    wE, bE, wF, bF, w1, b1, w2, b2 = params
    out_dim = w2.shape[1]
    assert out_dim <= LANES

    # [2,128] input-projection weight: row 0 = E path (cols 0:64), row 1 = F path.
    wef = jnp.zeros((2, H_CAT), jnp.float32)
    wef = wef.at[0, :H1].set(wE[0]).at[1, H1:].set(wF[0])

    # fc1 weight padded to 128 output columns (zeros) -> intermediate stays dense.
    w1p = jnp.zeros((H_CAT, LANES), jnp.float32).at[:, :H1].set(w1)

    # fc2 weight padded to 128x128 (extra rows multiply zero lanes of h).
    w2p = jnp.zeros((LANES, LANES), jnp.float32).at[:H1, :out_dim].set(w2)

    # All four biases packed into a single [3,128] array (1 DMA instead of 4).
    biases = jnp.zeros((3, LANES), jnp.float32)
    biases = biases.at[0, :H1].set(bE[0]).at[0, H1:].set(bF[0])   # cat(bE, bF)
    biases = biases.at[1, :H1].set(b1[0])                          # b1 (cols 64.. zero)
    biases = biases.at[2, :out_dim].set(b2[0])                     # b2 padded
    return (wef, w1p, w2p, biases), out_dim


def mlp_model2_forward(A, B, C, D, E, F, G, H, I, packed, out_dim, *, tile_b=1024):
    """Forward pass of MLPModel2. Only E and F participate (as in the reference)."""
    del A, B, C, D, G, H, I  # unused by the PyTorch forward as well
    wef, w1p, w2p, biases = packed
    batch = E.shape[0]

    # Pack E and F into one [batch, 2] operand (single DMA for the per-row data).
    ef = jnp.concatenate([E.astype(jnp.float32), F.astype(jnp.float32)], axis=1)

    # Batch tiling: TILE_B rows per grid step (multiple of 8 for f32 sublanes).
    tile = min(tile_b, _round_up(batch, 8))
    padded = _round_up(batch, tile)
    if padded != batch:
        ef = jnp.pad(ef, ((0, padded - batch), (0, 0)))
    grid = (padded // tile,)

    flops = 2 * padded * (2 * LANES + LANES * LANES + LANES * LANES)
    bytes_accessed = 4 * (padded * 2 + 2 * LANES + 2 * LANES * LANES
                          + 3 * LANES + padded * LANES)

    out = pl.pallas_call(
        mlp2_kernel,
        out_shape=jax.ShapeDtypeStruct((padded, LANES), jnp.float32),
        grid_spec=pltpu.PrefetchScalarGridSpec(
            num_scalar_prefetch=0,
            grid=grid,
            in_specs=[
                pl.BlockSpec((tile, 2), lambda i: (i, 0)),        # EF rows (tiled)
                pl.BlockSpec((2, LANES), lambda i: (0, 0)),       # Wef  (resident)
                pl.BlockSpec((H_CAT, LANES), lambda i: (0, 0)),   # W1p  (resident)
                pl.BlockSpec((LANES, LANES), lambda i: (0, 0)),   # W2p  (resident)
                pl.BlockSpec((3, LANES), lambda i: (0, 0)),       # biases (resident)
            ],
            out_specs=pl.BlockSpec((tile, LANES), lambda i: (i, 0)),
        ),
        compiler_params=pltpu.CompilerParams(
            dimension_semantics=("parallel",)),
        cost_estimate=pl.CostEstimate(
            flops=flops, transcendentals=0, bytes_accessed=bytes_accessed),
    )(ef, wef, w1p, w2p, biases)

    # Slice lane-padded / batch-padded output back to the logical shape.
    return out[:batch, :out_dim]


def init_params(key, output_dim):
    """Deterministic parameter init matching MLPModel2's layer shapes."""
    ks = jax.random.split(key, 8)

    def lin(kw, kb, fan_in, fan_out):
        # uniform(-1/sqrt(fan_in), 1/sqrt(fan_in)), like torch.nn.Linear default
        bound = 1.0 / (fan_in ** 0.5)
        w = jax.random.uniform(kw, (fan_in, fan_out), jnp.float32, -bound, bound)
        b = jax.random.uniform(kb, (1, fan_out), jnp.float32, -bound, bound)
        return w, b

    wE, bE = lin(ks[0], ks[1], 1, 64)            # fc_E1: Linear(1, 64)
    wF, bF = lin(ks[2], ks[3], 1, 64)            # fc_F1: Linear(1, 64)
    w1, b1 = lin(ks[4], ks[5], 128, 64)          # fc1  : Linear(128, 64)
    w2, b2 = lin(ks[6], ks[7], 64, output_dim)   # fc2  : Linear(64, output_dim)
    return (wE, bE, wF, bF, w1, b1, w2, b2)


if __name__ == "__main__":
    key = jax.random.PRNGKey(0)
    batch = 8
    output_dim = 8

    params = init_params(key, output_dim)
    packed, out_dim = pack_params(params)

    # Nine inputs A..I, each [batch, 1]; only E and F participate in forward.
    in_keys = jax.random.split(jax.random.PRNGKey(1), 9)
    A, B, C, D, E, F, G, H, I = [
        jax.random.normal(k, (batch, 1), jnp.float32) for k in in_keys
    ]

    out = mlp_model2_forward(A, B, C, D, E, F, G, H, I, packed, out_dim)
    out = jax.block_until_ready(out)

    # Pure-JAX reference check of the original (unpacked) math.
    wE, bE, wF, bF, w1, b1, w2, b2 = params
    x_e = jnp.maximum(E @ wE + bE, 0.0)
    x_f = jnp.maximum(F @ wF + bF, 0.0)
    ref = jnp.maximum(jnp.concatenate([x_e, x_f], axis=1) @ w1 + b1, 0.0) @ w2 + b2
    assert out.shape == (batch, output_dim)
    assert jnp.allclose(out, ref, atol=1e-5, rtol=1e-5)

    print("KERNEL_OK")
</pallas_src>

<mosaic_0001>
module attributes {stable_mosaic.version = 11 : i64} {
  func.func @mlp2_kernel(%arg0: i32, %arg1: memref<8x2xf32, #tpu.memory_space<vmem>>, %arg2: memref<2x128xf32, #tpu.memory_space<vmem>>, %arg3: memref<128x128xf32, #tpu.memory_space<vmem>>, %arg4: memref<128x128xf32, #tpu.memory_space<vmem>>, %arg5: memref<3x128xf32, #tpu.memory_space<vmem>>, %arg6: memref<8x128xf32, #tpu.memory_space<vmem>>) attributes {dimension_semantics = [#tpu.dimension_semantics<parallel>], iteration_bounds = array<i64: 1>, scalar_prefetch = 0 : i64, scratch_operands = 0 : i64, tpu.core_type = #tpu.core_type<tc>, window_params = [{transform_indices = @transform_0, window_bounds = array<i64: 8, 2>}, {pipeline_mode = #tpu.pipeline_mode<synchronous>, transform_indices = @transform_1, window_bounds = array<i64: 2, 128>}, {pipeline_mode = #tpu.pipeline_mode<synchronous>, transform_indices = @transform_2, window_bounds = array<i64: 128, 128>}, {pipeline_mode = #tpu.pipeline_mode<synchronous>, transform_indices = @transform_3, window_bounds = array<i64: 128, 128>}, {pipeline_mode = #tpu.pipeline_mode<synchronous>, transform_indices = @transform_4, window_bounds = array<i64: 3, 128>}, {transform_indices = @transform_5, window_bounds = array<i64: 8, 128>}]} {
    %c0 = arith.constant 0 : index
    %c0_0 = arith.constant 0 : index
    %0 = vector.load %arg1[%c0, %c0_0] : memref<8x2xf32, #tpu.memory_space<vmem>>, vector<8x2xf32>
    %c0_1 = arith.constant 0 : index
    %c0_2 = arith.constant 0 : index
    %1 = vector.load %arg2[%c0_1, %c0_2] : memref<2x128xf32, #tpu.memory_space<vmem>>, vector<2x128xf32>
    %cst = arith.constant dense<0.000000e+00> : vector<8x128xf32>
    %2 = tpu.matmul %0, %1, %cst {dimension_numbers = #tpu.dot_dimension_numbers<[1], [0], [0], [1], [0, 0, 1, 1], [], []>} : vector<8x2xf32>, vector<2x128xf32>, vector<8x128xf32> -> vector<8x128xf32>
    %c0_3 = arith.constant 0 : index
    %c0_4 = arith.constant 0 : index
    %3 = vector.load %arg5[%c0_3, %c0_4] : memref<3x128xf32, #tpu.memory_space<vmem>>, vector<1x128xf32>
    %4 = vector.broadcast %3 : vector<1x128xf32> to vector<8x128xf32>
    %5 = arith.addf %2, %4 : vector<8x128xf32>
    %cst_5 = arith.constant 0.000000e+00 : f32
    %6 = vector.broadcast %cst_5 : f32 to vector<8x128xf32>
    %7 = arith.maximumf %5, %6 : vector<8x128xf32>
    %c0_6 = arith.constant 0 : index
    %c0_7 = arith.constant 0 : index
    %8 = vector.load %arg3[%c0_6, %c0_7] : memref<128x128xf32, #tpu.memory_space<vmem>>, vector<128x128xf32>
    %cst_8 = arith.constant dense<0.000000e+00> : vector<8x128xf32>
    %9 = tpu.matmul %7, %8, %cst_8 {dimension_numbers = #tpu.dot_dimension_numbers<[1], [0], [0], [1], [0, 0, 1, 1], [], []>} : vector<8x128xf32>, vector<128x128xf32>, vector<8x128xf32> -> vector<8x128xf32>
    %c1 = arith.constant 1 : index
    %c0_9 = arith.constant 0 : index
    %10 = vector.load %arg5[%c1, %c0_9] : memref<3x128xf32, #tpu.memory_space<vmem>>, vector<1x128xf32>
    %11 = vector.broadcast %10 : vector<1x128xf32> to vector<8x128xf32>
    %12 = arith.addf %9, %11 : vector<8x128xf32>
    %cst_10 = arith.constant 0.000000e+00 : f32
    %13 = vector.broadcast %cst_10 : f32 to vector<8x128xf32>
    %14 = arith.maximumf %12, %13 : vector<8x128xf32>
    %c0_11 = arith.constant 0 : index
    %c0_12 = arith.constant 0 : index
    %15 = vector.load %arg4[%c0_11, %c0_12] : memref<128x128xf32, #tpu.memory_space<vmem>>, vector<128x128xf32>
    %cst_13 = arith.constant dense<0.000000e+00> : vector<8x128xf32>
    %16 = tpu.matmul %14, %15, %cst_13 {dimension_numbers = #tpu.dot_dimension_numbers<[1], [0], [0], [1], [0, 0, 1, 1], [], []>} : vector<8x128xf32>, vector<128x128xf32>, vector<8x128xf32> -> vector<8x128xf32>
    %c2 = arith.constant 2 : index
    %c0_14 = arith.constant 0 : index
    %17 = vector.load %arg5[%c2, %c0_14] : memref<3x128xf32, #tpu.memory_space<vmem>>, vector<1x128xf32>
    %18 = vector.broadcast %17 : vector<1x128xf32> to vector<8x128xf32>
    %19 = arith.addf %16, %18 : vector<8x128xf32>
    %c0_15 = arith.constant 0 : index
    %c0_16 = arith.constant 0 : index
    %20 = vector.load %arg6[%c0_15, %c0_16] : memref<8x128xf32, #tpu.memory_space<vmem>>, vector<8x128xf32>
    tpu.vector_store %arg6[%c0_15, %c0_16], %19 {strides = array<i32>} : memref<8x128xf32, #tpu.memory_space<vmem>>, vector<8x128xf32>,
    return
  }
  func.func @transform_0(%arg0: i32) -> (i32, i32) {
    %c0_i32 = arith.constant 0 : i32
    %c0_i32_0 = arith.constant 0 : i32
    return %arg0, %c0_i32 : i32, i32
  }
  func.func @transform_1(%arg0: i32) -> (i32, i32) {
    %c0_i32 = arith.constant 0 : i32
    %c0_i32_0 = arith.constant 0 : i32
    %c0_i32_1 = arith.constant 0 : i32
    return %c0_i32, %c0_i32_0 : i32, i32
  }
  func.func @transform_2(%arg0: i32) -> (i32, i32) {
    %c0_i32 = arith.constant 0 : i32
    %c0_i32_0 = arith.constant 0 : i32
    %c0_i32_1 = arith.constant 0 : i32
    return %c0_i32, %c0_i32_0 : i32, i32
  }
  func.func @transform_3(%arg0: i32) -> (i32, i32) {
    %c0_i32 = arith.constant 0 : i32
    %c0_i32_0 = arith.constant 0 : i32
    %c0_i32_1 = arith.constant 0 : i32
    return %c0_i32, %c0_i32_0 : i32, i32
  }
  func.func @transform_4(%arg0: i32) -> (i32, i32) {
    %c0_i32 = arith.constant 0 : i32
    %c0_i32_0 = arith.constant 0 : i32
    %c0_i32_1 = arith.constant 0 : i32
    return %c0_i32, %c0_i32_0 : i32, i32
  }
  func.func @transform_5(%arg0: i32) -> (i32, i32) {
    %c0_i32 = arith.constant 0 : i32
    %c0_i32_0 = arith.constant 0 : i32
    return %arg0, %c0_i32 : i32, i32
  }
}

</mosaic_0001>

<llo_original>
// kernel: tpu_custom_call.1
$region0: #{tpu_custom_call.1}
  #allocation0 [shape = 'u32[]', space=smem, size = 0x4, offset = 0x4, fixed_abs, tag = 'smem constant byte address 0x4 - core index']
  #allocation1 [shape = 'u32[72,128]{1,0:T(1,128)}', space=vmem, size = 0x9000, scoped, tag = 'internal scratch']
  %s0 = inlined_call_operand.vmem [shape: f32[8,2], index: 0, kind: input, shape index: {}]
  %s1 = inlined_call_operand.vmem [shape: f32[2,128], index: 1, kind: input, shape index: {}]
  %s2 = inlined_call_operand.hbm [shape: f32[128,128], index: 2, kind: input, shape index: {}]
  %s3 = inlined_call_operand.hbm [shape: f32[128,128], index: 3, kind: input, shape index: {}]
  %s4 = inlined_call_operand.vmem [shape: f32[3,128], index: 4, kind: input, shape index: {}]
  %s5 = inlined_call_operand.hbm [shape: f32[8,128], index: 5, kind: output, shape index: {}]
  %s6 = sld [smem:[#allocation0]]
  $region38: #{tpu_custom_call.1} parent=0
    _
  %s8 = ssub.s32 1, %s6
  %s9 = scalar_select 0, %s8, %s6
  $region1: #{tpu_custom_call.1} parent=0
    #allocation2 [shape = 'u8[65536]{0}', space=vmem, size = 0x10000, scoped, tag = 'input window, operand 2, single buffered']
    #allocation3 [shape = 's32[1]{0}', space=sflag, size = 0x4, scoped, tag = 'scoped memory for tpu_custom_call.1']
    #allocation4 [shape = 's32[1]{0}', space=sflag, size = 0x4, scoped, tag = 'scoped memory for tpu_custom_call.1']
    #allocation5 [shape = 'u8[65536]{0}', space=vmem, size = 0x10000, scoped, tag = 'input window, operand 3, single buffered']
    #allocation6 [shape = 's32[1]{0}', space=sflag, size = 0x4, scoped, tag = 'scoped memory for tpu_custom_call.1']
    #allocation7 [shape = 'u8[4096]{0}', space=vmem, size = 0x1000, scoped, tag = 'output window, operand 0, single buffered']
    %10 = vsyncpa [#allocation3], 0
    %11 = vsyncpa [#allocation6], 0
    %12 = vsyncpa [#allocation4], 0
    // Predicated region
    $region2: #{tpu_custom_call.1} parent=1 // pred_check
      _
    $region3: #{tpu_custom_call.1} parent=1 // pred_check_branch
      %14 = sbr.rel (0) target = $region5
    $region4: #{tpu_custom_call.1} parent=1 // pred_region
      _
    $region5: #{tpu_custom_call.1} parent=1 // pred_fallthru
      _
    // Predicated region
    $region6: #{tpu_custom_call.1} parent=1 // pred_check
      _
    $region7: #{tpu_custom_call.1} parent=1 // pred_check_branch
      %16 = sbr.rel (0) target = $region9
    $region8: #{tpu_custom_call.1} parent=1 // pred_region
      _
    $region9: #{tpu_custom_call.1} parent=1 // pred_fallthru
      _
    // Predicated region
    $region10: #{tpu_custom_call.1} parent=1 // pred_check
      _
    $region11: #{tpu_custom_call.1} parent=1 // pred_check_branch
      %18 = sbr.rel (0) target = $region13
    $region12: #{tpu_custom_call.1} parent=1 // pred_region
      %20 = vsyncadd [#allocation3], 0
      %s21 = sshll.u32 %s2, 4
      %s22 = int_to_ptr.hbm [resolvable:$true] %s21
      %s23 = sshll.u32 [#allocation2], 4
      %s24 = int_to_ptr.vmem [resolvable:$true] %s23
      %29 = dma.hbm_to_vmem [thread:$0]  %s22, 2048, %s24, [#allocation3], 128, 128, 8
    $region13: #{tpu_custom_call.1} parent=1 // pred_fallthru
      _
    // Predicated region
    $region14: #{tpu_custom_call.1} parent=1 // pred_check
      _
    $region15: #{tpu_custom_call.1} parent=1 // pred_check_branch
      %31 = sbr.rel (0) target = $region17
    $region16: #{tpu_custom_call.1} parent=1 // pred_region
      %33 = vsyncadd [#allocation6], 0
      %s34 = sshll.u32 %s3, 4
      %s35 = int_to_ptr.hbm [resolvable:$true] %s34
      %s36 = sshll.u32 [#allocation5], 4
      %s37 = int_to_ptr.vmem [resolvable:$true] %s36
      %42 = dma.hbm_to_vmem [thread:$0]  %s35, 2048, %s37, [#allocation6], 128, 128, 8
    $region17: #{tpu_custom_call.1} parent=1 // pred_fallthru
      _
    // Predicated region
    $region18: #{tpu_custom_call.1} parent=1 // pred_check
      _
    $region19: #{tpu_custom_call.1} parent=1 // pred_check_branch
      %44 = sbr.rel (0) target = $region21
    $region20: #{tpu_custom_call.1} parent=1 // pred_region
      _
    $region21: #{tpu_custom_call.1} parent=1 // pred_fallthru
      _
    // Predicated region
    $region22: #{tpu_custom_call.1} parent=1 // pred_check
      _
    $region23: #{tpu_custom_call.1} parent=1 // pred_check_branch
      %46 = sbr.rel (0) target = $region25
    $region24: #{tpu_custom_call.1} parent=1 // pred_region
      %48 = dma.done [#allocation3], 2048
    $region25: #{tpu_custom_call.1} parent=1 // pred_fallthru
      _
    // Predicated region
    $region26: #{tpu_custom_call.1} parent=1 // pred_check
      _
    $region27: #{tpu_custom_call.1} parent=1 // pred_check_branch
      %50 = sbr.rel (0) target = $region29
    $region28: #{tpu_custom_call.1} parent=1 // pred_region
      %52 = dma.done [#allocation6], 2048
    $region29: #{tpu_custom_call.1} parent=1 // pred_fallthru
      _
    %v53 = vld [vmem:[%s0] sm:$0xff]
    %v54 = vld [vmem:[%s1] sm:$0x3]
    %v55 = vld [vmem:[%s4] sm:$0x1]
    %v56 = vperm.slane %v55, 0
    %vm57 = vcmask 15360
    %v59 = vsel %vm57, %v53, 0
    %vm61 = vcmask 1041408
    %v63 = vsel %vm61, %v54, 0
    %65 = vmatpush.msra.mxu0 0.0
    %66 = vmatpush.msra.mxu0 0.0
    %67 = vmatpush.msra.mxu0 0.0
    %68 = vmatpush.msra.mxu0 0.0
    %69 = vmatpush.msra.mxu0 0.0
    %70 = vmatpush.msra.mxu0 0.0
    %71 = vmatpush.msra.mxu0 0.0
    %72 = vmatpush.msra.mxu0 0.0
    %73 = vmatpush.msra.mxu0 0.0
    %74 = vmatpush.msra.mxu0 0.0
    %75 = vmatpush.msra.mxu0 0.0
    %76 = vmatpush.msra.mxu0 0.0
    %77 = vmatpush.msra.mxu0 0.0
    %78 = vmatpush.msra.mxu0 0.0
    %79 = vmatpush.msra.mxu0 0.0
    %80 = vmatpush.msra.mxu0 %v63
    %81 = vmatmul.f32.gmra.mxu0 %v59
    %v82 = vpop.f32.mrf.mxu0
    %v83 = vadd.f32 %v56, %v82
    %84 = vdwg.mxu0
    %v85 = vmax.f32 %v83, 0.0
    %v86 = vld [vmem:[#allocation2] sm:$0xff]
    %v87 = vld [vmem:[#allocation2 + $0x8] sm:$0xff]
    %v88 = vld [vmem:[#allocation2 + $0x10] sm:$0xff]
    %v89 = vld [vmem:[#allocation2 + $0x18] sm:$0xff]
    %v90 = vld [vmem:[#allocation2 + $0x20] sm:$0xff]
    %v91 = vld [vmem:[#allocation2 + $0x28] sm:$0xff]
    %v92 = vld [vmem:[#allocation2 + $0x30] sm:$0xff]
    %v93 = vld [vmem:[#allocation2 + $0x38] sm:$0xff]
    %v94 = vld [vmem:[#allocation2 + $0x40] sm:$0xff]
    %v95 = vld [vmem:[#allocation2 + $0x48] sm:$0xff]
    %v96 = vld [vmem:[#allocation2 + $0x50] sm:$0xff]
    %v97 = vld [vmem:[#allocation2 + $0x58] sm:$0xff]
    %v98 = vld [vmem:[#allocation2 + $0x60] sm:$0xff]
    %v99 = vld [vmem:[#allocation2 + $0x68] sm:$0xff]
    %v100 = vld [vmem:[#allocation2 + $0x70] sm:$0xff]
    %v101 = vld [vmem:[#allocation2 + $0x78] sm:$0xff]
    %v102 = vld [vmem:[%s4 + $0x1] sm:$0x1]
    %v103 = vperm.slane %v102, 0
    %104 = vmatpush.msra.mxu0 %v101
    %105 = vmatpush.msra.mxu0 %v100
    %106 = vmatpush.msra.mxu0 %v99
    %107 = vmatpush.msra.mxu0 %v98
    %108 = vmatpush.msra.mxu0 %v97
    %109 = vmatpush.msra.mxu0 %v96
    %110 = vmatpush.msra.mxu0 %v95
    %111 = vmatpush.msra.mxu0 %v94
    %112 = vmatpush.msra.mxu0 %v93
    %113 = vmatpush.msra.mxu0 %v92
    %114 = vmatpush.msra.mxu0 %v91
    %115 = vmatpush.msra.mxu0 %v90
    %116 = vmatpush.msra.mxu0 %v89
    %117 = vmatpush.msra.mxu0 %v88
    %118 = vmatpush.msra.mxu0 %v87
    %119 = vmatpush.msra.mxu0 %v86
    %120 = vmatmul.f32.gmra.mxu0 %v85
    %v121 = vpop.f32.mrf.mxu0
    %v122 = vadd.f32 %v103, %v121
    %123 = vdwg.mxu0
    %v124 = vmax.f32 %v122, 0.0
    %v125 = vld [vmem:[#allocation5] sm:$0xff]
    %v126 = vld [vmem:[#allocation5 + $0x8] sm:$0xff]
    %v127 = vld [vmem:[#allocation5 + $0x10] sm:$0xff]
    %v128 = vld [vmem:[#allocation5 + $0x18] sm:$0xff]
    %v129 = vld [vmem:[#allocation5 + $0x20] sm:$0xff]
    %v130 = vld [vmem:[#allocation5 + $0x28] sm:$0xff]
    %v131 = vld [vmem:[#allocation5 + $0x30] sm:$0xff]
    %v132 = vld [vmem:[#allocation5 + $0x38] sm:$0xff]
    %v133 = vld [vmem:[#allocation5 + $0x40] sm:$0xff]
    %v134 = vld [vmem:[#allocation5 + $0x48] sm:$0xff]
    %v135 = vld [vmem:[#allocation5 + $0x50] sm:$0xff]
    %v136 = vld [vmem:[#allocation5 + $0x58] sm:$0xff]
    %v137 = vld [vmem:[#allocation5 + $0x60] sm:$0xff]
    %v138 = vld [vmem:[#allocation5 + $0x68] sm:$0xff]
    %v139 = vld [vmem:[#allocation5 + $0x70] sm:$0xff]
    %v140 = vld [vmem:[#allocation5 + $0x78] sm:$0xff]
    %v141 = vld [vmem:[%s4 + $0x2] sm:$0x1]
    %v142 = vperm.slane %v141, 0
    %143 = vmatpush.msra.mxu0 %v140
    %144 = vmatpush.msra.mxu0 %v139
    %145 = vmatpush.msra.mxu0 %v138
    %146 = vmatpush.msra.mxu0 %v137
    %147 = vmatpush.msra.mxu0 %v136
    %148 = vmatpush.msra.mxu0 %v135
    %149 = vmatpush.msra.mxu0 %v134
    %150 = vmatpush.msra.mxu0 %v133
    %151 = vmatpush.msra.mxu0 %v132
    %152 = vmatpush.msra.mxu0 %v131
    %153 = vmatpush.msra.mxu0 %v130
    %154 = vmatpush.msra.mxu0 %v129
    %155 = vmatpush.msra.mxu0 %v128
    %156 = vmatpush.msra.mxu0 %v127
    %157 = vmatpush.msra.mxu0 %v126
    %158 = vmatpush.msra.mxu0 %v125
    %159 = vmatmul.f32.gmra.mxu0 %v124
    %v160 = vpop.f32.mrf.mxu0
    %v161 = vadd.f32 %v142, %v160
    %162 = vdwg.mxu0
    %163 = vst [vmem:[#allocation7] sm:$0xff] %v161
    // Predicated region
    $region30: #{tpu_custom_call.1} parent=1 // pred_check
      _
    $region31: #{tpu_custom_call.1} parent=1 // pred_check_branch
      %165 = sbr.rel (0) target = $region33
    $region32: #{tpu_custom_call.1} parent=1 // pred_region
      %167 = vsyncadd [#allocation4], 0
      %s169 = sshll.u32 [#allocation7], 4
      %s170 = int_to_ptr.vmem [resolvable:$true] %s169
      %s171 = sshll.u32 %s5, 4
      %s172 = int_to_ptr.hbm [resolvable:$true] %s171
      %174 = dma.vmem_to_hbm [thread:$0]  %s170, 128, %s172, [#allocation4]
    $region33: #{tpu_custom_call.1} parent=1 // pred_fallthru
      _
    // Predicated region
    $region34: #{tpu_custom_call.1} parent=1 // pred_check
      _
    $region35: #{tpu_custom_call.1} parent=1 // pred_check_branch
      %176 = sbr.rel (0) target = $region37
    $region36: #{tpu_custom_call.1} parent=1 // pred_region
      %178 = dma.done [#allocation4], 128
    $region37: #{tpu_custom_call.1} parent=1 // pred_fallthru
      _
    %179 = vsyncpa [#allocation3], 1
    %180 = vsyncpa [#allocation6], 1
    %181 = vsyncpa [#allocation4], 1

</llo_original>
